<compile_context>
chip_gen: v7x
topology: tpu7x:2x2x1
jax: 0.10.0
libtpu: 0.0.40
codegen_flags: <defaults>
</compile_context>

<pallas_src>
import math

import jax
import jax.numpy as jnp
from jax.experimental import pallas as pl
from jax.experimental.pallas import tpu as pltpu


# ----------------------------------------------------------------------------
# Fused forward kernel: one invocation, layer loop unrolled inside.
# ----------------------------------------------------------------------------
def _lightgcl_kernel(ego_ref, adj_ref, p_ref, out_emb_ref, out_lr_ref):
    n_layers = out_emb_ref.shape[0] - 1

    x = ego_ref[...]           # (N, D) running GCN-chain state (lives in vregs)
    lr = x                     # (N, D) running low-rank-chain state
    out_emb_ref[0] = x         # layer 0 = ego embeddings for both chains
    out_lr_ref[0] = x

    adj = adj_ref[...]         # (N, N) symmetric normalized adjacency
    p = p_ref[...]             # (N, N) symmetric low-rank operator e*diag(v)*e.T

    # Statically unrolled layer loop: state carried in registers, each layer's
    # result written straight into its slot of the stacked outputs.
    for k in range(1, n_layers + 1):
        x = jnp.dot(adj, x, preferred_element_type=jnp.float32)
        lr = jnp.dot(p, lr, preferred_element_type=jnp.float32)
        out_emb_ref[k] = x
        out_lr_ref[k] = lr


def lightgcl_forward(user_emb, item_emb, dropped_adj, e, v, n_layers):
    ego = jnp.concatenate([user_emb, item_emb], axis=0)   # (N, D)
    N, D = ego.shape
    L = n_layers

    # Loop-invariant pre-fold of the low-rank operator (done once, outside the
    # kernel, in full f32 precision).  P is symmetric, so it can feed the
    # kernel directly with no transpose.  Only appropriate while N is small.
    p = jnp.dot(e * v[None, :], e.T, precision=jax.lax.Precision.HIGHEST)

    out_emb, out_lr = pl.pallas_call(
        _lightgcl_kernel,
        out_shape=(jax.ShapeDtypeStruct((L + 1, N, D), jnp.float32),
                   jax.ShapeDtypeStruct((L + 1, N, D), jnp.float32)),
        in_specs=[
            pl.BlockSpec(memory_space=pltpu.MemorySpace.VMEM),   # ego  (N, D)
            pl.BlockSpec(memory_space=pltpu.MemorySpace.VMEM),   # adj  (N, N)
            pl.BlockSpec(memory_space=pltpu.MemorySpace.VMEM),   # P    (N, N)
        ],
        out_specs=(
            pl.BlockSpec(memory_space=pltpu.MemorySpace.VMEM),
            pl.BlockSpec(memory_space=pltpu.MemorySpace.VMEM),
        ),
    )(ego, dropped_adj, p)

    return out_emb, out_lr


# ----------------------------------------------------------------------------
# Deterministic parameter / input construction
# ----------------------------------------------------------------------------
def xavier_uniform(key, shape):
    fan_in, fan_out = shape[0], shape[1]
    bound = math.sqrt(6.0 / (fan_in + fan_out))
    return jax.random.uniform(key, shape, jnp.float32, -bound, bound)


if __name__ == "__main__":
    user_num, item_num = 48, 80
    emb_size = 32
    n_layers = 2
    rank = 16
    N = user_num + item_num  # 128

    key = jax.random.PRNGKey(0)
    k_u, k_i, k_adj, k_e, k_v = jax.random.split(key, 5)

    user_emb = xavier_uniform(k_u, (user_num, emb_size))
    item_emb = xavier_uniform(k_i, (item_num, emb_size))

    # Synthetic symmetric normalized (dense) adjacency standing in for the
    # dropped sparse Laplacian.
    raw = (jax.random.uniform(k_adj, (N, N)) < 0.05).astype(jnp.float32)
    adj = jnp.maximum(raw, raw.T)
    deg = jnp.maximum(adj.sum(axis=1), 1.0)
    d_inv_sqrt = 1.0 / jnp.sqrt(deg)
    dropped_adj = adj * d_inv_sqrt[:, None] * d_inv_sqrt[None, :]

    # Synthetic eigen pair (stands in for the pickled SVD of the graph).
    e_vec = jax.random.normal(k_e, (N, rank), jnp.float32) / math.sqrt(N)
    v_val = jax.random.uniform(k_v, (rank,), jnp.float32, 0.1, 1.0)

    fwd = jax.jit(lightgcl_forward, static_argnums=(5,))
    all_emb, all_lr = fwd(user_emb, item_emb, dropped_adj, e_vec, v_val,
                          n_layers)
    jax.block_until_ready((all_emb, all_lr))

    # Plain-JAX reference matching the PyTorch module (factored low-rank form).
    hi = jax.lax.Precision.HIGHEST
    ego = jnp.concatenate([user_emb, item_emb], axis=0)
    ref_emb, ref_lr = [ego], [ego]
    for _ in range(n_layers):
        ref_emb.append(jnp.matmul(dropped_adj, ref_emb[-1], precision=hi))
        t = jnp.matmul(e_vec.T, ref_lr[-1], precision=hi)
        ref_lr.append(jnp.matmul(e_vec, v_val[:, None] * t, precision=hi))
    ref_emb = jnp.stack(ref_emb, 0)
    ref_lr = jnp.stack(ref_lr, 0)

    assert all_emb.shape == (n_layers + 1, N, emb_size)
    assert all_lr.shape == (n_layers + 1, N, emb_size)
    assert jnp.allclose(all_emb, ref_emb, atol=1e-4, rtol=1e-4)
    assert jnp.allclose(all_lr, ref_lr, atol=1e-4, rtol=1e-4)

    print("KERNEL_OK")
</pallas_src>

<mosaic_0001>
module attributes {stable_mosaic.version = 11 : i64} {
  func.func @_lightgcl_kernel(%arg0: memref<128x32xf32, #tpu.memory_space<vmem>>, %arg1: memref<128x128xf32, #tpu.memory_space<vmem>>, %arg2: memref<128x128xf32, #tpu.memory_space<vmem>>, %arg3: memref<3x128x32xf32, #tpu.memory_space<vmem>>, %arg4: memref<3x128x32xf32, #tpu.memory_space<vmem>>) attributes {dimension_semantics = [], scalar_prefetch = 0 : i64, scratch_operands = 0 : i64, tpu.core_type = #tpu.core_type<tc>} {
    %c0 = arith.constant 0 : index
    %c0_0 = arith.constant 0 : index
    %0 = vector.load %arg0[%c0, %c0_0] : memref<128x32xf32, #tpu.memory_space<vmem>>, vector<128x32xf32>
    %c0_1 = arith.constant 0 : index
    %c0_2 = arith.constant 0 : index
    %c0_3 = arith.constant 0 : index
    %1 = vector.load %arg3[%c0_1, %c0_2, %c0_3] : memref<3x128x32xf32, #tpu.memory_space<vmem>>, vector<1x128x32xf32>
    %2 = vector.shape_cast %1 : vector<1x128x32xf32> to vector<128x32xf32>
    %3 = vector.shape_cast %0 : vector<128x32xf32> to vector<1x128x32xf32>
    tpu.vector_store %arg3[%c0_1, %c0_2, %c0_3], %3 {strides = array<i32>} : memref<3x128x32xf32, #tpu.memory_space<vmem>>, vector<1x128x32xf32>,
    %c0_4 = arith.constant 0 : index
    %c0_5 = arith.constant 0 : index
    %c0_6 = arith.constant 0 : index
    %4 = vector.load %arg4[%c0_4, %c0_5, %c0_6] : memref<3x128x32xf32, #tpu.memory_space<vmem>>, vector<1x128x32xf32>
    %5 = vector.shape_cast %4 : vector<1x128x32xf32> to vector<128x32xf32>
    %6 = vector.shape_cast %0 : vector<128x32xf32> to vector<1x128x32xf32>
    tpu.vector_store %arg4[%c0_4, %c0_5, %c0_6], %6 {strides = array<i32>} : memref<3x128x32xf32, #tpu.memory_space<vmem>>, vector<1x128x32xf32>,
    %c0_7 = arith.constant 0 : index
    %c0_8 = arith.constant 0 : index
    %7 = vector.load %arg1[%c0_7, %c0_8] : memref<128x128xf32, #tpu.memory_space<vmem>>, vector<128x128xf32>
    %c0_9 = arith.constant 0 : index
    %c0_10 = arith.constant 0 : index
    %8 = vector.load %arg2[%c0_9, %c0_10] : memref<128x128xf32, #tpu.memory_space<vmem>>, vector<128x128xf32>
    %cst = arith.constant dense<0.000000e+00> : vector<128x32xf32>
    %9 = tpu.matmul %7, %0, %cst {dimension_numbers = #tpu.dot_dimension_numbers<[1], [0], [0], [1], [0, 0, 1, 1], [], []>} : vector<128x128xf32>, vector<128x32xf32>, vector<128x32xf32> -> vector<128x32xf32>
    %cst_11 = arith.constant dense<0.000000e+00> : vector<128x32xf32>
    %10 = tpu.matmul %8, %0, %cst_11 {dimension_numbers = #tpu.dot_dimension_numbers<[1], [0], [0], [1], [0, 0, 1, 1], [], []>} : vector<128x128xf32>, vector<128x32xf32>, vector<128x32xf32> -> vector<128x32xf32>
    %c1 = arith.constant 1 : index
    %c0_12 = arith.constant 0 : index
    %c0_13 = arith.constant 0 : index
    %11 = vector.load %arg3[%c1, %c0_12, %c0_13] : memref<3x128x32xf32, #tpu.memory_space<vmem>>, vector<1x128x32xf32>
    %12 = vector.shape_cast %11 : vector<1x128x32xf32> to vector<128x32xf32>
    %13 = vector.shape_cast %9 : vector<128x32xf32> to vector<1x128x32xf32>
    tpu.vector_store %arg3[%c1, %c0_12, %c0_13], %13 {strides = array<i32>} : memref<3x128x32xf32, #tpu.memory_space<vmem>>, vector<1x128x32xf32>,
    %c1_14 = arith.constant 1 : index
    %c0_15 = arith.constant 0 : index
    %c0_16 = arith.constant 0 : index
    %14 = vector.load %arg4[%c1_14, %c0_15, %c0_16] : memref<3x128x32xf32, #tpu.memory_space<vmem>>, vector<1x128x32xf32>
    %15 = vector.shape_cast %14 : vector<1x128x32xf32> to vector<128x32xf32>
    %16 = vector.shape_cast %10 : vector<128x32xf32> to vector<1x128x32xf32>
    tpu.vector_store %arg4[%c1_14, %c0_15, %c0_16], %16 {strides = array<i32>} : memref<3x128x32xf32, #tpu.memory_space<vmem>>, vector<1x128x32xf32>,
    %cst_17 = arith.constant dense<0.000000e+00> : vector<128x32xf32>
    %17 = tpu.matmul %7, %9, %cst_17 {dimension_numbers = #tpu.dot_dimension_numbers<[1], [0], [0], [1], [0, 0, 1, 1], [], []>} : vector<128x128xf32>, vector<128x32xf32>, vector<128x32xf32> -> vector<128x32xf32>
    %cst_18 = arith.constant dense<0.000000e+00> : vector<128x32xf32>
    %18 = tpu.matmul %8, %10, %cst_18 {dimension_numbers = #tpu.dot_dimension_numbers<[1], [0], [0], [1], [0, 0, 1, 1], [], []>} : vector<128x128xf32>, vector<128x32xf32>, vector<128x32xf32> -> vector<128x32xf32>
    %c2 = arith.constant 2 : index
    %c0_19 = arith.constant 0 : index
    %c0_20 = arith.constant 0 : index
    %19 = vector.load %arg3[%c2, %c0_19, %c0_20] : memref<3x128x32xf32, #tpu.memory_space<vmem>>, vector<1x128x32xf32>
    %20 = vector.shape_cast %19 : vector<1x128x32xf32> to vector<128x32xf32>
    %21 = vector.shape_cast %17 : vector<128x32xf32> to vector<1x128x32xf32>
    tpu.vector_store %arg3[%c2, %c0_19, %c0_20], %21 {strides = array<i32>} : memref<3x128x32xf32, #tpu.memory_space<vmem>>, vector<1x128x32xf32>,
    %c2_21 = arith.constant 2 : index
    %c0_22 = arith.constant 0 : index
    %c0_23 = arith.constant 0 : index
    %22 = vector.load %arg4[%c2_21, %c0_22, %c0_23] : memref<3x128x32xf32, #tpu.memory_space<vmem>>, vector<1x128x32xf32>
    %23 = vector.shape_cast %22 : vector<1x128x32xf32> to vector<128x32xf32>
    %24 = vector.shape_cast %18 : vector<128x32xf32> to vector<1x128x32xf32>
    tpu.vector_store %arg4[%c2_21, %c0_22, %c0_23], %24 {strides = array<i32>} : memref<3x128x32xf32, #tpu.memory_space<vmem>>, vector<1x128x32xf32>,
    return
  }
}

</mosaic_0001>

<llo_original>
// kernel: lightgcl_forward.1
$region0: #{lightgcl_forward.1}
  #allocation0 [shape = 'u32[]', space=smem, size = 0x4, offset = 0x4, fixed_abs, tag = 'smem constant byte address 0x4 - core index']
  #allocation1 [shape = 'u32[144,128]{1,0:T(1,128)}', space=vmem, size = 0x12000, scoped, tag = 'internal scratch']
  %s0 = inlined_call_operand.vmem [shape: f32[128,32], index: 0, kind: input, shape index: {}]
  %s1 = inlined_call_operand.vmem [shape: f32[128,128], index: 1, kind: input, shape index: {}]
  %s2 = inlined_call_operand.vmem [shape: f32[128,128], index: 2, kind: input, shape index: {}]
  %s3 = inlined_call_operand.vmem [shape: f32[3,128,32], index: 3, kind: output, shape index: {0}]
  %s4 = inlined_call_operand.vmem [shape: f32[3,128,32], index: 4, kind: output, shape index: {1}]
  %5 = xla_tuple %s3, %s4
  %s6 = sld [smem:[#allocation0]]
  $region30: #{lightgcl_forward.1} parent=0
    _
  %s8 = ssub.s32 1, %s6
  %s9 = scalar_select 0, %s8, %s6
  // Predicated region
  $region2: #{lightgcl_forward.1} parent=0 // pred_check
    _
  $region3: #{lightgcl_forward.1} parent=0 // pred_check_branch
    %11 = sbr.rel (0) target = $region5
  $region4: #{lightgcl_forward.1} parent=0 // pred_region
    _
  $region5: #{lightgcl_forward.1} parent=0 // pred_fallthru
    _
  // Predicated region
  $region6: #{lightgcl_forward.1} parent=0 // pred_check
    _
  $region7: #{lightgcl_forward.1} parent=0 // pred_check_branch
    %13 = sbr.rel (0) target = $region9
  $region8: #{lightgcl_forward.1} parent=0 // pred_region
    _
  $region9: #{lightgcl_forward.1} parent=0 // pred_fallthru
    _
  // Predicated region
  $region10: #{lightgcl_forward.1} parent=0 // pred_check
    _
  $region11: #{lightgcl_forward.1} parent=0 // pred_check_branch
    %15 = sbr.rel (0) target = $region13
  $region12: #{lightgcl_forward.1} parent=0 // pred_region
    _
  $region13: #{lightgcl_forward.1} parent=0 // pred_fallthru
    _
  %v16 = vld [vmem:[%s0] sm:$0xff]
  %v17 = vld [vmem:[%s0 + $0x8] sm:$0xff]
  %v18 = vld [vmem:[%s0 + $0x10] sm:$0xff]
  %v19 = vld [vmem:[%s0 + $0x18] sm:$0xff]
  %v20 = vld [vmem:[%s0 + $0x20] sm:$0xff]
  %v21 = vld [vmem:[%s0 + $0x28] sm:$0xff]
  %v22 = vld [vmem:[%s0 + $0x30] sm:$0xff]
  %v23 = vld [vmem:[%s0 + $0x38] sm:$0xff]
  %v24 = vld [vmem:[%s0 + $0x40] sm:$0xff]
  %v25 = vld [vmem:[%s0 + $0x48] sm:$0xff]
  %v26 = vld [vmem:[%s0 + $0x50] sm:$0xff]
  %v27 = vld [vmem:[%s0 + $0x58] sm:$0xff]
  %v28 = vld [vmem:[%s0 + $0x60] sm:$0xff]
  %v29 = vld [vmem:[%s0 + $0x68] sm:$0xff]
  %v30 = vld [vmem:[%s0 + $0x70] sm:$0xff]
  %v31 = vld [vmem:[%s0 + $0x78] sm:$0xff]
  %vm32 = vcmask 261120
  %33 = vst.msk [vmem:[%s3] sm:$0xff] %vm32, %v16
  %34 = vst.msk [vmem:[%s3 + $0x8] sm:$0xff] %vm32, %v17
  %35 = vst.msk [vmem:[%s3 + $0x10] sm:$0xff] %vm32, %v18
  %36 = vst.msk [vmem:[%s3 + $0x18] sm:$0xff] %vm32, %v19
  %37 = vst.msk [vmem:[%s3 + $0x20] sm:$0xff] %vm32, %v20
  %38 = vst.msk [vmem:[%s3 + $0x28] sm:$0xff] %vm32, %v21
  %39 = vst.msk [vmem:[%s3 + $0x30] sm:$0xff] %vm32, %v22
  %40 = vst.msk [vmem:[%s3 + $0x38] sm:$0xff] %vm32, %v23
  %41 = vst.msk [vmem:[%s3 + $0x40] sm:$0xff] %vm32, %v24
  %42 = vst.msk [vmem:[%s3 + $0x48] sm:$0xff] %vm32, %v25
  %43 = vst.msk [vmem:[%s3 + $0x50] sm:$0xff] %vm32, %v26
  %44 = vst.msk [vmem:[%s3 + $0x58] sm:$0xff] %vm32, %v27
  %45 = vst.msk [vmem:[%s3 + $0x60] sm:$0xff] %vm32, %v28
  %46 = vst.msk [vmem:[%s3 + $0x68] sm:$0xff] %vm32, %v29
  %47 = vst.msk [vmem:[%s3 + $0x70] sm:$0xff] %vm32, %v30
  %48 = vst.msk [vmem:[%s3 + $0x78] sm:$0xff] %vm32, %v31
  %49 = vst.msk [vmem:[%s4] sm:$0xff] %vm32, %v16
  %50 = vst.msk [vmem:[%s4 + $0x8] sm:$0xff] %vm32, %v17
  %51 = vst.msk [vmem:[%s4 + $0x10] sm:$0xff] %vm32, %v18
  %52 = vst.msk [vmem:[%s4 + $0x18] sm:$0xff] %vm32, %v19
  %53 = vst.msk [vmem:[%s4 + $0x20] sm:$0xff] %vm32, %v20
  %54 = vst.msk [vmem:[%s4 + $0x28] sm:$0xff] %vm32, %v21
  %55 = vst.msk [vmem:[%s4 + $0x30] sm:$0xff] %vm32, %v22
  %56 = vst.msk [vmem:[%s4 + $0x38] sm:$0xff] %vm32, %v23
  %57 = vst.msk [vmem:[%s4 + $0x40] sm:$0xff] %vm32, %v24
  %58 = vst.msk [vmem:[%s4 + $0x48] sm:$0xff] %vm32, %v25
  %59 = vst.msk [vmem:[%s4 + $0x50] sm:$0xff] %vm32, %v26
  %60 = vst.msk [vmem:[%s4 + $0x58] sm:$0xff] %vm32, %v27
  %61 = vst.msk [vmem:[%s4 + $0x60] sm:$0xff] %vm32, %v28
  %62 = vst.msk [vmem:[%s4 + $0x68] sm:$0xff] %vm32, %v29
  %63 = vst.msk [vmem:[%s4 + $0x70] sm:$0xff] %vm32, %v30
  %64 = vst.msk [vmem:[%s4 + $0x78] sm:$0xff] %vm32, %v31
  %v65 = vld [vmem:[%s1] sm:$0xff]
  %v66 = vld [vmem:[%s1 + $0x8] sm:$0xff]
  %v67 = vld [vmem:[%s1 + $0x10] sm:$0xff]
  %v68 = vld [vmem:[%s1 + $0x18] sm:$0xff]
  %v69 = vld [vmem:[%s1 + $0x20] sm:$0xff]
  %v70 = vld [vmem:[%s1 + $0x28] sm:$0xff]
  %v71 = vld [vmem:[%s1 + $0x30] sm:$0xff]
  %v72 = vld [vmem:[%s1 + $0x38] sm:$0xff]
  %v73 = vld [vmem:[%s1 + $0x40] sm:$0xff]
  %v74 = vld [vmem:[%s1 + $0x48] sm:$0xff]
  %v75 = vld [vmem:[%s1 + $0x50] sm:$0xff]
  %v76 = vld [vmem:[%s1 + $0x58] sm:$0xff]
  %v77 = vld [vmem:[%s1 + $0x60] sm:$0xff]
  %v78 = vld [vmem:[%s1 + $0x68] sm:$0xff]
  %v79 = vld [vmem:[%s1 + $0x70] sm:$0xff]
  %v80 = vld [vmem:[%s1 + $0x78] sm:$0xff]
  %v81 = vld [vmem:[%s2] sm:$0xff]
  %v82 = vld [vmem:[%s2 + $0x8] sm:$0xff]
  %v83 = vld [vmem:[%s2 + $0x10] sm:$0xff]
  %v84 = vld [vmem:[%s2 + $0x18] sm:$0xff]
  %v85 = vld [vmem:[%s2 + $0x20] sm:$0xff]
  %v86 = vld [vmem:[%s2 + $0x28] sm:$0xff]
  %v87 = vld [vmem:[%s2 + $0x30] sm:$0xff]
  %v88 = vld [vmem:[%s2 + $0x38] sm:$0xff]
  %v89 = vld [vmem:[%s2 + $0x40] sm:$0xff]
  %v90 = vld [vmem:[%s2 + $0x48] sm:$0xff]
  %v91 = vld [vmem:[%s2 + $0x50] sm:$0xff]
  %v92 = vld [vmem:[%s2 + $0x58] sm:$0xff]
  %v93 = vld [vmem:[%s2 + $0x60] sm:$0xff]
  %v94 = vld [vmem:[%s2 + $0x68] sm:$0xff]
  %v95 = vld [vmem:[%s2 + $0x70] sm:$0xff]
  %v96 = vld [vmem:[%s2 + $0x78] sm:$0xff]
  %97 = vmatprep.subr.mxu0 0.0
  %98 = vmatpush1.msra.mxu0 %v16
  %99 = vmatprep.subr.mxu0 0.0
  %100 = vmatpush1.msra.mxu0 %v17
  %101 = vmatprep.subr.mxu0 0.0
  %102 = vmatpush1.msra.mxu0 %v18
  %103 = vmatprep.subr.mxu0 0.0
  %104 = vmatpush1.msra.mxu0 %v19
  %105 = vmatprep.subr.mxu0 0.0
  %106 = vmatpush1.msra.mxu0 %v20
  %107 = vmatprep.subr.mxu0 0.0
  %108 = vmatpush1.msra.mxu0 %v21
  %109 = vmatprep.subr.mxu0 0.0
  %110 = vmatpush1.msra.mxu0 %v22
  %111 = vmatprep.subr.mxu0 0.0
  %112 = vmatpush1.msra.mxu0 %v23
  %113 = vmatprep.subr.mxu0 0.0
  %114 = vmatpush1.msra.mxu0 %v24
  %115 = vmatprep.subr.mxu0 0.0
  %116 = vmatpush1.msra.mxu0 %v25
  %117 = vmatprep.subr.mxu0 0.0
  %118 = vmatpush1.msra.mxu0 %v26
  %119 = vmatprep.subr.mxu0 0.0
  %120 = vmatpush1.msra.mxu0 %v27
  %121 = vmatprep.subr.mxu0 0.0
  %122 = vmatpush1.msra.mxu0 %v28
  %123 = vmatprep.subr.mxu0 0.0
  %124 = vmatpush1.msra.mxu0 %v29
  %125 = vmatprep.subr.mxu0 0.0
  %126 = vmatpush1.msra.mxu0 %v30
  %127 = vmatprep.subr.mxu0 0.0
  %128 = vmatpush1.msra.mxu0 %v31
  %129 = vmatprep.subr.mxu0 0.0
  %130 = vmatpush1.msra.mxu0 0.0
  %131 = vmatprep.subr.mxu0 0.0
  %132 = vmatpush1.msra.mxu0 0.0
  %133 = vmatprep.subr.mxu0 0.0
  %134 = vmatpush1.msra.mxu0 0.0
  %135 = vmatprep.subr.mxu0 0.0
  %136 = vmatpush1.msra.mxu0 0.0
  %137 = vmatprep.subr.mxu0 0.0
  %138 = vmatpush1.msra.mxu0 0.0
  %139 = vmatprep.subr.mxu0 0.0
  %140 = vmatpush1.msra.mxu0 0.0
  %141 = vmatprep.subr.mxu0 0.0
  %142 = vmatpush1.msra.mxu0 0.0
  %143 = vmatprep.subr.mxu0 0.0
  %144 = vmatpush1.msra.mxu0 0.0
  %145 = vmatprep.subr.mxu0 0.0
  %146 = vmatpush1.msra.mxu0 0.0
  %147 = vmatprep.subr.mxu0 0.0
  %148 = vmatpush1.msra.mxu0 0.0
  %149 = vmatprep.subr.mxu0 0.0
  %150 = vmatpush1.msra.mxu0 0.0
  %151 = vmatprep.subr.mxu0 0.0
  %152 = vmatpush1.msra.mxu0 0.0
  %153 = vmatprep.subr.mxu0 0.0
  %154 = vmatpush1.msra.mxu0 0.0
  %155 = vmatprep.subr.mxu0 0.0
  %156 = vmatpush1.msra.mxu0 0.0
  %157 = vmatprep.subr.mxu0 0.0
  %158 = vmatpush1.msra.mxu0 0.0
  %159 = vmatprep.subr.mxu0 0.0
  %160 = vmatpush1.msra.mxu0 0.0
  %161 = vmatprep.mubr.f32.mxu0 0.0
  %162 = vmatmul.mubr.f32.gmra.mrb[0].mxu0 %v65
  %v163 = vpop.f32.mrb[0].mxu0
  %v164 = vadd.f32 0.0, %v163
  %v165 = vpop.f32.mrb[0].mxu0
  %166 = vmatprep.mubr.f32.mxu0 0.0
  %167 = vmatmul.mubr.f32.gmra.mrb[0].mxu0 %v66
  %v168 = vpop.f32.mrb[0].mxu0
  %v169 = vadd.f32 0.0, %v168
  %v170 = vpop.f32.mrb[0].mxu0
  %171 = vmatprep.mubr.f32.mxu0 0.0
  %172 = vmatmul.mubr.f32.gmra.mrb[0].mxu0 %v67
  %v173 = vpop.f32.mrb[0].mxu0
  %v174 = vadd.f32 0.0, %v173
  %v175 = vpop.f32.mrb[0].mxu0
  %176 = vmatprep.mubr.f32.mxu0 0.0
  %177 = vmatmul.mubr.f32.gmra.mrb[0].mxu0 %v68
  %v178 = vpop.f32.mrb[0].mxu0
  %v179 = vadd.f32 0.0, %v178
  %v180 = vpop.f32.mrb[0].mxu0
  %181 = vmatprep.mubr.f32.mxu0 0.0
  %182 = vmatmul.mubr.f32.gmra.mrb[0].mxu0 %v69
  %v183 = vpop.f32.mrb[0].mxu0
  %v184 = vadd.f32 0.0, %v183
  %v185 = vpop.f32.mrb[0].mxu0
  %186 = vmatprep.mubr.f32.mxu0 0.0
  %187 = vmatmul.mubr.f32.gmra.mrb[0].mxu0 %v70
  %v188 = vpop.f32.mrb[0].mxu0
  %v189 = vadd.f32 0.0, %v188
  %v190 = vpop.f32.mrb[0].mxu0
  %191 = vmatprep.mubr.f32.mxu0 0.0
  %192 = vmatmul.mubr.f32.gmra.mrb[0].mxu0 %v71
  %v193 = vpop.f32.mrb[0].mxu0
  %v194 = vadd.f32 0.0, %v193
  %v195 = vpop.f32.mrb[0].mxu0
  %196 = vmatprep.mubr.f32.mxu0 0.0
  %197 = vmatmul.mubr.f32.gmra.mrb[0].mxu0 %v72
  %v198 = vpop.f32.mrb[0].mxu0
  %v199 = vadd.f32 0.0, %v198
  %v200 = vpop.f32.mrb[0].mxu0
  %201 = vmatprep.mubr.f32.mxu0 0.0
  %202 = vmatmul.mubr.f32.gmra.mrb[0].mxu0 %v73
  %v203 = vpop.f32.mrb[0].mxu0
  %v204 = vadd.f32 0.0, %v203
  %v205 = vpop.f32.mrb[0].mxu0
  %206 = vmatprep.mubr.f32.mxu0 0.0
  %207 = vmatmul.mubr.f32.gmra.mrb[0].mxu0 %v74
  %v208 = vpop.f32.mrb[0].mxu0
  %v209 = vadd.f32 0.0, %v208
  %v210 = vpop.f32.mrb[0].mxu0
  %211 = vmatprep.mubr.f32.mxu0 0.0
  %212 = vmatmul.mubr.f32.gmra.mrb[0].mxu0 %v75
  %v213 = vpop.f32.mrb[0].mxu0
  %v214 = vadd.f32 0.0, %v213
  %v215 = vpop.f32.mrb[0].mxu0
  %216 = vmatprep.mubr.f32.mxu0 0.0
  %217 = vmatmul.mubr.f32.gmra.mrb[0].mxu0 %v76
  %v218 = vpop.f32.mrb[0].mxu0
  %v219 = vadd.f32 0.0, %v218
  %v220 = vpop.f32.mrb[0].mxu0
  %221 = vmatprep.mubr.f32.mxu0 0.0
  %222 = vmatmul.mubr.f32.gmra.mrb[0].mxu0 %v77
  %v223 = vpop.f32.mrb[0].mxu0
  %v224 = vadd.f32 0.0, %v223
  %v225 = vpop.f32.mrb[0].mxu0
  %226 = vmatprep.mubr.f32.mxu0 0.0
  %227 = vmatmul.mubr.f32.gmra.mrb[0].mxu0 %v78
  %v228 = vpop.f32.mrb[0].mxu0
  %v229 = vadd.f32 0.0, %v228
  %v230 = vpop.f32.mrb[0].mxu0
  %231 = vmatprep.mubr.f32.mxu0 0.0
  %232 = vmatmul.mubr.f32.gmra.mrb[0].mxu0 %v79
  %v233 = vpop.f32.mrb[0].mxu0
  %v234 = vadd.f32 0.0, %v233
  %v235 = vpop.f32.mrb[0].mxu0
  %236 = vmatprep.mubr.f32.mxu0 0.0
  %237 = vmatmul.mubr.f32.gmra.mrb[0].mxu0 %v80
  %v238 = vpop.f32.mrb[0].mxu0
  %v239 = vadd.f32 0.0, %v238
  %v240 = vpop.f32.mrb[0].mxu0
  %241 = vdwg.mxu0
  %242 = vmatprep.subr.mxu0 0.0
  %243 = vmatpush1.msra.mxu0 %v16
  %244 = vmatprep.subr.mxu0 0.0
  %245 = vmatpush1.msra.mxu0 %v17
  %246 = vmatprep.subr.mxu0 0.0
  %247 = vmatpush1.msra.mxu0 %v18
  %248 = vmatprep.subr.mxu0 0.0
  %249 = vmatpush1.msra.mxu0 %v19
  %250 = vmatprep.subr.mxu0 0.0
  %251 = vmatpush1.msra.mxu0 %v20
  %252 = vmatprep.subr.mxu0 0.0
  %253 = vmatpush1.msra.mxu0 %v21
  %254 = vmatprep.subr.mxu0 0.0
  %255 = vmatpush1.msra.mxu0 %v22
  %256 = vmatprep.subr.mxu0 0.0
  %257 = vmatpush1.msra.mxu0 %v23
  %258 = vmatprep.subr.mxu0 0.0
  %259 = vmatpush1.msra.mxu0 %v24
  %260 = vmatprep.subr.mxu0 0.0
  %261 = vmatpush1.msra.mxu0 %v25
  %262 = vmatprep.subr.mxu0 0.0
  %263 = vmatpush1.msra.mxu0 %v26
  %264 = vmatprep.subr.mxu0 0.0
  %265 = vmatpush1.msra.mxu0 %v27
  %266 = vmatprep.subr.mxu0 0.0
  %267 = vmatpush1.msra.mxu0 %v28
  %268 = vmatprep.subr.mxu0 0.0
  %269 = vmatpush1.msra.mxu0 %v29
  %270 = vmatprep.subr.mxu0 0.0
  %271 = vmatpush1.msra.mxu0 %v30
  %272 = vmatprep.subr.mxu0 0.0
  %273 = vmatpush1.msra.mxu0 %v31
  %274 = vmatprep.subr.mxu0 0.0
  %275 = vmatpush1.msra.mxu0 0.0
  %276 = vmatprep.subr.mxu0 0.0
  %277 = vmatpush1.msra.mxu0 0.0
  %278 = vmatprep.subr.mxu0 0.0
  %279 = vmatpush1.msra.mxu0 0.0
  %280 = vmatprep.subr.mxu0 0.0
  %281 = vmatpush1.msra.mxu0 0.0
  %282 = vmatprep.subr.mxu0 0.0
  %283 = vmatpush1.msra.mxu0 0.0
  %284 = vmatprep.subr.mxu0 0.0
  %285 = vmatpush1.msra.mxu0 0.0
  %286 = vmatprep.subr.mxu0 0.0
  %287 = vmatpush1.msra.mxu0 0.0
  %288 = vmatprep.subr.mxu0 0.0
  %289 = vmatpush1.msra.mxu0 0.0
  %290 = vmatprep.subr.mxu0 0.0
  %291 = vmatpush1.msra.mxu0 0.0
  %292 = vmatprep.subr.mxu0 0.0
  %293 = vmatpush1.msra.mxu0 0.0
  %294 = vmatprep.subr.mxu0 0.0
  %295 = vmatpush1.msra.mxu0 0.0
  %296 = vmatprep.subr.mxu0 0.0
  %297 = vmatpush1.msra.mxu0 0.0
  %298 = vmatprep.subr.mxu0 0.0
  %299 = vmatpush1.msra.mxu0 0.0
  %300 = vmatprep.subr.mxu0 0.0
  %301 = vmatpush1.msra.mxu0 0.0
  %302 = vmatprep.subr.mxu0 0.0
  %303 = vmatpush1.msra.mxu0 0.0
  %304 = vmatprep.subr.mxu0 0.0
  %305 = vmatpush1.msra.mxu0 0.0
  %306 = vmatprep.mubr.f32.mxu0 0.0
  %307 = vmatmul.mubr.f32.gmra.mrb[0].mxu0 %v81
  %v308 = vpop.f32.mrb[0].mxu0
  %v309 = vadd.f32 0.0, %v308
  %v310 = vpop.f32.mrb[0].mxu0
  %311 = vmatprep.mubr.f32.mxu0 0.0
  %312 = vmatmul.mubr.f32.gmra.mrb[0].mxu0 %v82
  %v313 = vpop.f32.mrb[0].mxu0
  %v314 = vadd.f32 0.0, %v313
  %v315 = vpop.f32.mrb[0].mxu0
  %316 = vmatprep.mubr.f32.mxu0 0.0
  %317 = vmatmul.mubr.f32.gmra.mrb[0].mxu0 %v83
  %v318 = vpop.f32.mrb[0].mxu0
  %v319 = vadd.f32 0.0, %v318
  %v320 = vpop.f32.mrb[0].mxu0
  %321 = vmatprep.mubr.f32.mxu0 0.0
  %322 = vmatmul.mubr.f32.gmra.mrb[0].mxu0 %v84
  %v323 = vpop.f32.mrb[0].mxu0
  %v324 = vadd.f32 0.0, %v323
  %v325 = vpop.f32.mrb[0].mxu0
  %326 = vmatprep.mubr.f32.mxu0 0.0
  %327 = vmatmul.mubr.f32.gmra.mrb[0].mxu0 %v85
  %v328 = vpop.f32.mrb[0].mxu0
  %v329 = vadd.f32 0.0, %v328
  %v330 = vpop.f32.mrb[0].mxu0
  %331 = vmatprep.mubr.f32.mxu0 0.0
  %332 = vmatmul.mubr.f32.gmra.mrb[0].mxu0 %v86
  %v333 = vpop.f32.mrb[0].mxu0
  %v334 = vadd.f32 0.0, %v333
  %v335 = vpop.f32.mrb[0].mxu0
  %336 = vmatprep.mubr.f32.mxu0 0.0
  %337 = vmatmul.mubr.f32.gmra.mrb[0].mxu0 %v87
  %v338 = vpop.f32.mrb[0].mxu0
  %v339 = vadd.f32 0.0, %v338
  %v340 = vpop.f32.mrb[0].mxu0
  %341 = vmatprep.mubr.f32.mxu0 0.0
  %342 = vmatmul.mubr.f32.gmra.mrb[0].mxu0 %v88
  %v343 = vpop.f32.mrb[0].mxu0
  %v344 = vadd.f32 0.0, %v343
  %v345 = vpop.f32.mrb[0].mxu0
  %346 = vmatprep.mubr.f32.mxu0 0.0
  %347 = vmatmul.mubr.f32.gmra.mrb[0].mxu0 %v89
  %v348 = vpop.f32.mrb[0].mxu0
  %v349 = vadd.f32 0.0, %v348
  %v350 = vpop.f32.mrb[0].mxu0
  %351 = vmatprep.mubr.f32.mxu0 0.0
  %352 = vmatmul.mubr.f32.gmra.mrb[0].mxu0 %v90
  %v353 = vpop.f32.mrb[0].mxu0
  %v354 = vadd.f32 0.0, %v353
  %v355 = vpop.f32.mrb[0].mxu0
  %356 = vmatprep.mubr.f32.mxu0 0.0
  %357 = vmatmul.mubr.f32.gmra.mrb[0].mxu0 %v91
  %v358 = vpop.f32.mrb[0].mxu0
  %v359 = vadd.f32 0.0, %v358
  %v360 = vpop.f32.mrb[0].mxu0
  %361 = vmatprep.mubr.f32.mxu0 0.0
  %362 = vmatmul.mubr.f32.gmra.mrb[0].mxu0 %v92
  %v363 = vpop.f32.mrb[0].mxu0
  %v364 = vadd.f32 0.0, %v363
  %v365 = vpop.f32.mrb[0].mxu0
  %366 = vmatprep.mubr.f32.mxu0 0.0
  %367 = vmatmul.mubr.f32.gmra.mrb[0].mxu0 %v93
  %v368 = vpop.f32.mrb[0].mxu0
  %v369 = vadd.f32 0.0, %v368
  %v370 = vpop.f32.mrb[0].mxu0
  %371 = vmatprep.mubr.f32.mxu0 0.0
  %372 = vmatmul.mubr.f32.gmra.mrb[0].mxu0 %v94
  %v373 = vpop.f32.mrb[0].mxu0
  %v374 = vadd.f32 0.0, %v373
  %v375 = vpop.f32.mrb[0].mxu0
  %376 = vmatprep.mubr.f32.mxu0 0.0
  %377 = vmatmul.mubr.f32.gmra.mrb[0].mxu0 %v95
  %v378 = vpop.f32.mrb[0].mxu0
  %v379 = vadd.f32 0.0, %v378
  %v380 = vpop.f32.mrb[0].mxu0
  %381 = vmatprep.mubr.f32.mxu0 0.0
  %382 = vmatmul.mubr.f32.gmra.mrb[0].mxu0 %v96
  %v383 = vpop.f32.mrb[0].mxu0
  %v384 = vadd.f32 0.0, %v383
  %v385 = vpop.f32.mrb[0].mxu0
  %386 = vdwg.mxu0
  %s387 = scalar_lea.vmem %s3, 128
  %388 = vst.msk [vmem:[%s387] sm:$0xff] %vm32, %v164
  %389 = vst.msk [vmem:[%s387 + $0x8] sm:$0xff] %vm32, %v169
  %390 = vst.msk [vmem:[%s387 + $0x10] sm:$0xff] %vm32, %v174
  %391 = vst.msk [vmem:[%s387 + $0x18] sm:$0xff] %vm32, %v179
  %392 = vst.msk [vmem:[%s387 + $0x20] sm:$0xff] %vm32, %v184
  %393 = vst.msk [vmem:[%s387 + $0x28] sm:$0xff] %vm32, %v189
  %394 = vst.msk [vmem:[%s387 + $0x30] sm:$0xff] %vm32, %v194
  %395 = vst.msk [vmem:[%s387 + $0x38] sm:$0xff] %vm32, %v199
  %396 = vst.msk [vmem:[%s387 + $0x40] sm:$0xff] %vm32, %v204
  %397 = vst.msk [vmem:[%s387 + $0x48] sm:$0xff] %vm32, %v209
  %398 = vst.msk [vmem:[%s387 + $0x50] sm:$0xff] %vm32, %v214
  %399 = vst.msk [vmem:[%s387 + $0x58] sm:$0xff] %vm32, %v219
  %400 = vst.msk [vmem:[%s387 + $0x60] sm:$0xff] %vm32, %v224
  %401 = vst.msk [vmem:[%s387 + $0x68] sm:$0xff] %vm32, %v229
  %402 = vst.msk [vmem:[%s387 + $0x70] sm:$0xff] %vm32, %v234
  %403 = vst.msk [vmem:[%s387 + $0x78] sm:$0xff] %vm32, %v239
  %s404 = scalar_lea.vmem %s4, 128
  %405 = vst.msk [vmem:[%s404] sm:$0xff] %vm32, %v309
  %406 = vst.msk [vmem:[%s404 + $0x8] sm:$0xff] %vm32, %v314
  %407 = vst.msk [vmem:[%s404 + $0x10] sm:$0xff] %vm32, %v319
  %408 = vst.msk [vmem:[%s404 + $0x18] sm:$0xff] %vm32, %v324
  %409 = vst.msk [vmem:[%s404 + $0x20] sm:$0xff] %vm32, %v329
  %410 = vst.msk [vmem:[%s404 + $0x28] sm:$0xff] %vm32, %v334
  %411 = vst.msk [vmem:[%s404 + $0x30] sm:$0xff] %vm32, %v339
  %412 = vst.msk [vmem:[%s404 + $0x38] sm:$0xff] %vm32, %v344
  %413 = vst.msk [vmem:[%s404 + $0x40] sm:$0xff] %vm32, %v349
  %414 = vst.msk [vmem:[%s404 + $0x48] sm:$0xff] %vm32, %v354
  %415 = vst.msk [vmem:[%s404 + $0x50] sm:$0xff] %vm32, %v359
  %416 = vst.msk [vmem:[%s404 + $0x58] sm:$0xff] %vm32, %v364
  %417 = vst.msk [vmem:[%s404 + $0x60] sm:$0xff] %vm32, %v369
  %418 = vst.msk [vmem:[%s404 + $0x68] sm:$0xff] %vm32, %v374
  %419 = vst.msk [vmem:[%s404 + $0x70] sm:$0xff] %vm32, %v379
  %420 = vst.msk [vmem:[%s404 + $0x78] sm:$0xff] %vm32, %v384
  %421 = vmatprep.subr.mxu0 0.0
  %422 = vmatpush1.msra.mxu0 %v164
  %423 = vmatprep.subr.mxu0 0.0
  %424 = vmatpush1.msra.mxu0 %v169
  %425 = vmatprep.subr.mxu0 0.0
  %426 = vmatpush1.msra.mxu0 %v174
  %427 = vmatprep.subr.mxu0 0.0
  %428 = vmatpush1.msra.mxu0 %v179
  %429 = vmatprep.subr.mxu0 0.0
  %430 = vmatpush1.msra.mxu0 %v184
  %431 = vmatprep.subr.mxu0 0.0
  %432 = vmatpush1.msra.mxu0 %v189
  %433 = vmatprep.subr.mxu0 0.0
  %434 = vmatpush1.msra.mxu0 %v194
  %435 = vmatprep.subr.mxu0 0.0
  %436 = vmatpush1.msra.mxu0 %v199
  %437 = vmatprep.subr.mxu0 0.0
  %438 = vmatpush1.msra.mxu0 %v204
  %439 = vmatprep.subr.mxu0 0.0
  %440 = vmatpush1.msra.mxu0 %v209
  %441 = vmatprep.subr.mxu0 0.0
  %442 = vmatpush1.msra.mxu0 %v214
  %443 = vmatprep.subr.mxu0 0.0
  %444 = vmatpush1.msra.mxu0 %v219
  %445 = vmatprep.subr.mxu0 0.0
  %446 = vmatpush1.msra.mxu0 %v224
  %447 = vmatprep.subr.mxu0 0.0
  %448 = vmatpush1.msra.mxu0 %v229
  %449 = vmatprep.subr.mxu0 0.0
  %450 = vmatpush1.msra.mxu0 %v234
  %451 = vmatprep.subr.mxu0 0.0
  %452 = vmatpush1.msra.mxu0 %v239
  %453 = vmatprep.subr.mxu0 0.0
  %454 = vmatpush1.msra.mxu0 0.0
  %455 = vmatprep.subr.mxu0 0.0
  %456 = vmatpush1.msra.mxu0 0.0
  %457 = vmatprep.subr.mxu0 0.0
  %458 = vmatpush1.msra.mxu0 0.0
  %459 = vmatprep.subr.mxu0 0.0
  %460 = vmatpush1.msra.mxu0 0.0
  %461 = vmatprep.subr.mxu0 0.0
  %462 = vmatpush1.msra.mxu0 0.0
  %463 = vmatprep.subr.mxu0 0.0
  %464 = vmatpush1.msra.mxu0 0.0
  %465 = vmatprep.subr.mxu0 0.0
  %466 = vmatpush1.msra.mxu0 0.0
  %467 = vmatprep.subr.mxu0 0.0
  %468 = vmatpush1.msra.mxu0 0.0
  %469 = vmatprep.subr.mxu0 0.0
  %470 = vmatpush1.msra.mxu0 0.0
  %471 = vmatprep.subr.mxu0 0.0
  %472 = vmatpush1.msra.mxu0 0.0
  %473 = vmatprep.subr.mxu0 0.0
  %474 = vmatpush1.msra.mxu0 0.0
  %475 = vmatprep.subr.mxu0 0.0
  %476 = vmatpush1.msra.mxu0 0.0
  %477 = vmatprep.subr.mxu0 0.0
  %478 = vmatpush1.msra.mxu0 0.0
  %479 = vmatprep.subr.mxu0 0.0
  %480 = vmatpush1.msra.mxu0 0.0
  %481 = vmatprep.subr.mxu0 0.0
  %482 = vmatpush1.msra.mxu0 0.0
  %483 = vmatprep.subr.mxu0 0.0
  %484 = vmatpush1.msra.mxu0 0.0
  %485 = vmatprep.mubr.f32.mxu0 0.0
  %486 = vmatmul.mubr.f32.gmra.mrb[0].mxu0 %v65
  %v487 = vpop.f32.mrb[0].mxu0
  %v488 = vadd.f32 0.0, %v487
  %v489 = vpop.f32.mrb[0].mxu0
  %490 = vmatprep.mubr.f32.mxu0 0.0
  %491 = vmatmul.mubr.f32.gmra.mrb[0].mxu0 %v66
  %v492 = vpop.f32.mrb[0].mxu0
  %v493 = vadd.f32 0.0, %v492
  %v494 = vpop.f32.mrb[0].mxu0
  %495 = vmatprep.mubr.f32.mxu0 0.0
  %496 = vmatmul.mubr.f32.gmra.mrb[0].mxu0 %v67
  %v497 = vpop.f32.mrb[0].mxu0
  %v498 = vadd.f32 0.0, %v497
  %v499 = vpop.f32.mrb[0].mxu0
  %500 = vmatprep.mubr.f32.mxu0 0.0
  %501 = vmatmul.mubr.f32.gmra.mrb[0].mxu0 %v68
  %v502 = vpop.f32.mrb[0].mxu0
  %v503 = vadd.f32 0.0, %v502
  %v504 = vpop.f32.mrb[0].mxu0
  %505 = vmatprep.mubr.f32.mxu0 0.0
  %506 = vmatmul.mubr.f32.gmra.mrb[0].mxu0 %v69
  %v507 = vpop.f32.mrb[0].mxu0
  %v508 = vadd.f32 0.0, %v507
  %v509 = vpop.f32.mrb[0].mxu0
  %510 = vmatprep.mubr.f32.mxu0 0.0
  %511 = vmatmul.mubr.f32.gmra.mrb[0].mxu0 %v70
  %v512 = vpop.f32.mrb[0].mxu0
  %v513 = vadd.f32 0.0, %v512
  %v514 = vpop.f32.mrb[0].mxu0
  %515 = vmatprep.mubr.f32.mxu0 0.0
  %516 = vmatmul.mubr.f32.gmra.mrb[0].mxu0 %v71
  %v517 = vpop.f32.mrb[0].mxu0
  %v518 = vadd.f32 0.0, %v517
  %v519 = vpop.f32.mrb[0].mxu0
  %520 = vmatprep.mubr.f32.mxu0 0.0
  %521 = vmatmul.mubr.f32.gmra.mrb[0].mxu0 %v72
  %v522 = vpop.f32.mrb[0].mxu0
  %v523 = vadd.f32 0.0, %v522
  %v524 = vpop.f32.mrb[0].mxu0
  %525 = vmatprep.mubr.f32.mxu0 0.0
  %526 = vmatmul.mubr.f32.gmra.mrb[0].mxu0 %v73
  %v527 = vpop.f32.mrb[0].mxu0
  %v528 = vadd.f32 0.0, %v527
  %v529 = vpop.f32.mrb[0].mxu0
  %530 = vmatprep.mubr.f32.mxu0 0.0
  %531 = vmatmul.mubr.f32.gmra.mrb[0].mxu0 %v74
  %v532 = vpop.f32.mrb[0].mxu0
  %v533 = vadd.f32 0.0, %v532
  %v534 = vpop.f32.mrb[0].mxu0
  %535 = vmatprep.mubr.f32.mxu0 0.0
  %536 = vmatmul.mubr.f32.gmra.mrb[0].mxu0 %v75
  %v537 = vpop.f32.mrb[0].mxu0
  %v538 = vadd.f32 0.0, %v537
  %v539 = vpop.f32.mrb[0].mxu0
  %540 = vmatprep.mubr.f32.mxu0 0.0
  %541 = vmatmul.mubr.f32.gmra.mrb[0].mxu0 %v76
  %v542 = vpop.f32.mrb[0].mxu0
  %v543 = vadd.f32 0.0, %v542
  %v544 = vpop.f32.mrb[0].mxu0
  %545 = vmatprep.mubr.f32.mxu0 0.0
  %546 = vmatmul.mubr.f32.gmra.mrb[0].mxu0 %v77
  %v547 = vpop.f32.mrb[0].mxu0
  %v548 = vadd.f32 0.0, %v547
  %v549 = vpop.f32.mrb[0].mxu0
  %550 = vmatprep.mubr.f32.mxu0 0.0
  %551 = vmatmul.mubr.f32.gmra.mrb[0].mxu0 %v78
  %v552 = vpop.f32.mrb[0].mxu0
  %v553 = vadd.f32 0.0, %v552
  %v554 = vpop.f32.mrb[0].mxu0
  %555 = vmatprep.mubr.f32.mxu0 0.0
  %556 = vmatmul.mubr.f32.gmra.mrb[0].mxu0 %v79
  %v557 = vpop.f32.mrb[0].mxu0
  %v558 = vadd.f32 0.0, %v557
  %v559 = vpop.f32.mrb[0].mxu0
  %560 = vmatprep.mubr.f32.mxu0 0.0
  %561 = vmatmul.mubr.f32.gmra.mrb[0].mxu0 %v80
  %v562 = vpop.f32.mrb[0].mxu0
  %v563 = vadd.f32 0.0, %v562
  %v564 = vpop.f32.mrb[0].mxu0
  %565 = vdwg.mxu0
  %566 = vmatprep.subr.mxu0 0.0
  %567 = vmatpush1.msra.mxu0 %v309
  %568 = vmatprep.subr.mxu0 0.0
  %569 = vmatpush1.msra.mxu0 %v314
  %570 = vmatprep.subr.mxu0 0.0
  %571 = vmatpush1.msra.mxu0 %v319
  %572 = vmatprep.subr.mxu0 0.0
  %573 = vmatpush1.msra.mxu0 %v324
  %574 = vmatprep.subr.mxu0 0.0
  %575 = vmatpush1.msra.mxu0 %v329
  %576 = vmatprep.subr.mxu0 0.0
  %577 = vmatpush1.msra.mxu0 %v334
  %578 = vmatprep.subr.mxu0 0.0
  %579 = vmatpush1.msra.mxu0 %v339
  %580 = vmatprep.subr.mxu0 0.0
  %581 = vmatpush1.msra.mxu0 %v344
  %582 = vmatprep.subr.mxu0 0.0
  %583 = vmatpush1.msra.mxu0 %v349
  %584 = vmatprep.subr.mxu0 0.0
  %585 = vmatpush1.msra.mxu0 %v354
  %586 = vmatprep.subr.mxu0 0.0
  %587 = vmatpush1.msra.mxu0 %v359
  %588 = vmatprep.subr.mxu0 0.0
  %589 = vmatpush1.msra.mxu0 %v364
  %590 = vmatprep.subr.mxu0 0.0
  %591 = vmatpush1.msra.mxu0 %v369
  %592 = vmatprep.subr.mxu0 0.0
  %593 = vmatpush1.msra.mxu0 %v374
  %594 = vmatprep.subr.mxu0 0.0
  %595 = vmatpush1.msra.mxu0 %v379
  %596 = vmatprep.subr.mxu0 0.0
  %597 = vmatpush1.msra.mxu0 %v384
  %598 = vmatprep.subr.mxu0 0.0
  %599 = vmatpush1.msra.mxu0 0.0
  %600 = vmatprep.subr.mxu0 0.0
  %601 = vmatpush1.msra.mxu0 0.0
  %602 = vmatprep.subr.mxu0 0.0
  %603 = vmatpush1.msra.mxu0 0.0
  %604 = vmatprep.subr.mxu0 0.0
  %605 = vmatpush1.msra.mxu0 0.0
  %606 = vmatprep.subr.mxu0 0.0
  %607 = vmatpush1.msra.mxu0 0.0
  %608 = vmatprep.subr.mxu0 0.0
  %609 = vmatpush1.msra.mxu0 0.0
  %610 = vmatprep.subr.mxu0 0.0
  %611 = vmatpush1.msra.mxu0 0.0
  %612 = vmatprep.subr.mxu0 0.0
  %613 = vmatpush1.msra.mxu0 0.0
  %614 = vmatprep.subr.mxu0 0.0
  %615 = vmatpush1.msra.mxu0 0.0
  %616 = vmatprep.subr.mxu0 0.0
  %617 = vmatpush1.msra.mxu0 0.0
  %618 = vmatprep.subr.mxu0 0.0
  %619 = vmatpush1.msra.mxu0 0.0
  %620 = vmatprep.subr.mxu0 0.0
  %621 = vmatpush1.msra.mxu0 0.0
  %622 = vmatprep.subr.mxu0 0.0
  %623 = vmatpush1.msra.mxu0 0.0
  %624 = vmatprep.subr.mxu0 0.0
  %625 = vmatpush1.msra.mxu0 0.0
  %626 = vmatprep.subr.mxu0 0.0
  %627 = vmatpush1.msra.mxu0 0.0
  %628 = vmatprep.subr.mxu0 0.0
  %629 = vmatpush1.msra.mxu0 0.0
  %630 = vmatprep.mubr.f32.mxu0 0.0
  %631 = vmatmul.mubr.f32.gmra.mrb[0].mxu0 %v81
  %v632 = vpop.f32.mrb[0].mxu0
  %v633 = vadd.f32 0.0, %v632
  %v634 = vpop.f32.mrb[0].mxu0
  %635 = vmatprep.mubr.f32.mxu0 0.0
  %636 = vmatmul.mubr.f32.gmra.mrb[0].mxu0 %v82
  %v637 = vpop.f32.mrb[0].mxu0
  %v638 = vadd.f32 0.0, %v637
  %v639 = vpop.f32.mrb[0].mxu0
  %640 = vmatprep.mubr.f32.mxu0 0.0
  %641 = vmatmul.mubr.f32.gmra.mrb[0].mxu0 %v83
  %v642 = vpop.f32.mrb[0].mxu0
  %v643 = vadd.f32 0.0, %v642
  %v644 = vpop.f32.mrb[0].mxu0
  %645 = vmatprep.mubr.f32.mxu0 0.0
  %646 = vmatmul.mubr.f32.gmra.mrb[0].mxu0 %v84
  %v647 = vpop.f32.mrb[0].mxu0
  %v648 = vadd.f32 0.0, %v647
  %v649 = vpop.f32.mrb[0].mxu0
  %650 = vmatprep.mubr.f32.mxu0 0.0
  %651 = vmatmul.mubr.f32.gmra.mrb[0].mxu0 %v85
  %v652 = vpop.f32.mrb[0].mxu0
  %v653 = vadd.f32 0.0, %v652
  %v654 = vpop.f32.mrb[0].mxu0
  %655 = vmatprep.mubr.f32.mxu0 0.0
  %656 = vmatmul.mubr.f32.gmra.mrb[0].mxu0 %v86
  %v657 = vpop.f32.mrb[0].mxu0
  %v658 = vadd.f32 0.0, %v657
  %v659 = vpop.f32.mrb[0].mxu0
  %660 = vmatprep.mubr.f32.mxu0 0.0
  %661 = vmatmul.mubr.f32.gmra.mrb[0].mxu0 %v87
  %v662 = vpop.f32.mrb[0].mxu0
  %v663 = vadd.f32 0.0, %v662
  %v664 = vpop.f32.mrb[0].mxu0
  %665 = vmatprep.mubr.f32.mxu0 0.0
  %666 = vmatmul.mubr.f32.gmra.mrb[0].mxu0 %v88
  %v667 = vpop.f32.mrb[0].mxu0
  %v668 = vadd.f32 0.0, %v667
  %v669 = vpop.f32.mrb[0].mxu0
  %670 = vmatprep.mubr.f32.mxu0 0.0
  %671 = vmatmul.mubr.f32.gmra.mrb[0].mxu0 %v89
  %v672 = vpop.f32.mrb[0].mxu0
  %v673 = vadd.f32 0.0, %v672
  %v674 = vpop.f32.mrb[0].mxu0
  %675 = vmatprep.mubr.f32.mxu0 0.0
  %676 = vmatmul.mubr.f32.gmra.mrb[0].mxu0 %v90
  %v677 = vpop.f32.mrb[0].mxu0
  %v678 = vadd.f32 0.0, %v677
  %v679 = vpop.f32.mrb[0].mxu0
  %680 = vmatprep.mubr.f32.mxu0 0.0
  %681 = vmatmul.mubr.f32.gmra.mrb[0].mxu0 %v91
  %v682 = vpop.f32.mrb[0].mxu0
  %v683 = vadd.f32 0.0, %v682
  %v684 = vpop.f32.mrb[0].mxu0
  %685 = vmatprep.mubr.f32.mxu0 0.0
  %686 = vmatmul.mubr.f32.gmra.mrb[0].mxu0 %v92
  %v687 = vpop.f32.mrb[0].mxu0
  %v688 = vadd.f32 0.0, %v687
  %v689 = vpop.f32.mrb[0].mxu0
  %690 = vmatprep.mubr.f32.mxu0 0.0
  %691 = vmatmul.mubr.f32.gmra.mrb[0].mxu0 %v93
  %v692 = vpop.f32.mrb[0].mxu0
  %v693 = vadd.f32 0.0, %v692
  %v694 = vpop.f32.mrb[0].mxu0
  %695 = vmatprep.mubr.f32.mxu0 0.0
  %696 = vmatmul.mubr.f32.gmra.mrb[0].mxu0 %v94
  %v697 = vpop.f32.mrb[0].mxu0
  %v698 = vadd.f32 0.0, %v697
  %v699 = vpop.f32.mrb[0].mxu0
  %700 = vmatprep.mubr.f32.mxu0 0.0
  %701 = vmatmul.mubr.f32.gmra.mrb[0].mxu0 %v95
  %v702 = vpop.f32.mrb[0].mxu0
  %v703 = vadd.f32 0.0, %v702
  %v704 = vpop.f32.mrb[0].mxu0
  %705 = vmatprep.mubr.f32.mxu0 0.0
  %706 = vmatmul.mubr.f32.gmra.mrb[0].mxu0 %v96
  %v707 = vpop.f32.mrb[0].mxu0
  %v708 = vadd.f32 0.0, %v707
  %v709 = vpop.f32.mrb[0].mxu0
  %710 = vdwg.mxu0
  %s711 = scalar_lea.vmem %s3, 256
  %712 = vst.msk [vmem:[%s711] sm:$0xff] %vm32, %v488
  %713 = vst.msk [vmem:[%s711 + $0x8] sm:$0xff] %vm32, %v493
  %714 = vst.msk [vmem:[%s711 + $0x10] sm:$0xff] %vm32, %v498
  %715 = vst.msk [vmem:[%s711 + $0x18] sm:$0xff] %vm32, %v503
  %716 = vst.msk [vmem:[%s711 + $0x20] sm:$0xff] %vm32, %v508
  %717 = vst.msk [vmem:[%s711 + $0x28] sm:$0xff] %vm32, %v513
  %718 = vst.msk [vmem:[%s711 + $0x30] sm:$0xff] %vm32, %v518
  %719 = vst.msk [vmem:[%s711 + $0x38] sm:$0xff] %vm32, %v523
  %720 = vst.msk [vmem:[%s711 + $0x40] sm:$0xff] %vm32, %v528
  %721 = vst.msk [vmem:[%s711 + $0x48] sm:$0xff] %vm32, %v533
  %722 = vst.msk [vmem:[%s711 + $0x50] sm:$0xff] %vm32, %v538
  %723 = vst.msk [vmem:[%s711 + $0x58] sm:$0xff] %vm32, %v543
  %724 = vst.msk [vmem:[%s711 + $0x60] sm:$0xff] %vm32, %v548
  %725 = vst.msk [vmem:[%s711 + $0x68] sm:$0xff] %vm32, %v553
  %726 = vst.msk [vmem:[%s711 + $0x70] sm:$0xff] %vm32, %v558
  %727 = vst.msk [vmem:[%s711 + $0x78] sm:$0xff] %vm32, %v563
  %s728 = scalar_lea.vmem %s4, 256
  %729 = vst.msk [vmem:[%s728] sm:$0xff] %vm32, %v633
  %730 = vst.msk [vmem:[%s728 + $0x8] sm:$0xff] %vm32, %v638
  %731 = vst.msk [vmem:[%s728 + $0x10] sm:$0xff] %vm32, %v643
  %732 = vst.msk [vmem:[%s728 + $0x18] sm:$0xff] %vm32, %v648
  %733 = vst.msk [vmem:[%s728 + $0x20] sm:$0xff] %vm32, %v653
  %734 = vst.msk [vmem:[%s728 + $0x28] sm:$0xff] %vm32, %v658
  %735 = vst.msk [vmem:[%s728 + $0x30] sm:$0xff] %vm32, %v663
  %736 = vst.msk [vmem:[%s728 + $0x38] sm:$0xff] %vm32, %v668
  %737 = vst.msk [vmem:[%s728 + $0x40] sm:$0xff] %vm32, %v673
  %738 = vst.msk [vmem:[%s728 + $0x48] sm:$0xff] %vm32, %v678
  %739 = vst.msk [vmem:[%s728 + $0x50] sm:$0xff] %vm32, %v683
  %740 = vst.msk [vmem:[%s728 + $0x58] sm:$0xff] %vm32, %v688
  %741 = vst.msk [vmem:[%s728 + $0x60] sm:$0xff] %vm32, %v693
  %742 = vst.msk [vmem:[%s728 + $0x68] sm:$0xff] %vm32, %v698
  %743 = vst.msk [vmem:[%s728 + $0x70] sm:$0xff] %vm32, %v703
  %744 = vst.msk [vmem:[%s728 + $0x78] sm:$0xff] %vm32, %v708
  // Predicated region
  $region14: #{lightgcl_forward.1} parent=0 // pred_check
    _
  $region15: #{lightgcl_forward.1} parent=0 // pred_check_branch
    %746 = sbr.rel (0) target = $region17
  $region16: #{lightgcl_forward.1} parent=0 // pred_region
    _
  $region17: #{lightgcl_forward.1} parent=0 // pred_fallthru
    _
  // Predicated region
  $region18: #{lightgcl_forward.1} parent=0 // pred_check
    _
  $region19: #{lightgcl_forward.1} parent=0 // pred_check_branch
    %748 = sbr.rel (0) target = $region21
  $region20: #{lightgcl_forward.1} parent=0 // pred_region
    _
  $region21: #{lightgcl_forward.1} parent=0 // pred_fallthru
    _
  // Predicated region
  $region22: #{lightgcl_forward.1} parent=0 // pred_check
    _
  $region23: #{lightgcl_forward.1} parent=0 // pred_check_branch
    %750 = sbr.rel (0) target = $region25
  $region24: #{lightgcl_forward.1} parent=0 // pred_region
    _
  $region25: #{lightgcl_forward.1} parent=0 // pred_fallthru
    _
  // Predicated region
  $region26: #{lightgcl_forward.1} parent=0 // pred_check
    _
  $region27: #{lightgcl_forward.1} parent=0 // pred_check_branch
    %752 = sbr.rel (0) target = $region29
  $region28: #{lightgcl_forward.1} parent=0 // pred_region
    _
  $region29: #{lightgcl_forward.1} parent=0 // pred_fallthru
    _

</llo_original>
